<compile_context>
chip_gen: v6e
topology: v6e:2x2x1
jax: 0.10.0
libtpu: 0.0.40
codegen_flags: <defaults>
</compile_context>

<pallas_src>
import functools

import jax
import jax.numpy as jnp
from jax.experimental import pallas as pl
from jax.experimental.pallas import tpu as pltpu

LANES = 128
FWD_TM = 4096        # 4096 x 128 f32 = 2 MiB/block; 8 MiB double-buffered in+out.
MINMAX_TM = 2048     # init-time only; keeps nan-clean/mask temporaries small.
VMEM_LIMIT = 32 * 1024 * 1024


def _cdiv(a, b):
    return -(-a // b)


def _round_up(n, m):
    return ((n + m - 1) // m) * m


# -----------------------------------------------------------------------------
# Kernel 1: per-block partial min/max over `data` with nan/inf -> 0.
# Two-stage parallel reduction: each block reduces to an (8, 128) partial tile
# (unmasked full-vreg stores); the final reduce happens in the JAX wrapper.
# -----------------------------------------------------------------------------
def _minmax_kernel(total_ref, d_ref, pmin_ref, pmax_ref, *, tm, needs_mask):
    d = d_ref[...].astype(jnp.float32)
    d = jnp.where(jnp.isfinite(d), d, 0.0)            # nan_to_num(d, 0, 0, 0)
    if needs_mask:
        # Mask host-pad elements and ragged-block garbage with +/-inf AFTER the
        # nan-clean so padding cannot corrupt the min/max.
        row0 = pl.program_id(0) * tm
        rid = jax.lax.broadcasted_iota(jnp.int32, (tm, LANES), 0)
        cid = jax.lax.broadcasted_iota(jnp.int32, (tm, LANES), 1)
        valid = (row0 + rid) * LANES + cid < total_ref[0]
        d_min = jnp.where(valid, d, jnp.inf)
        d_max = jnp.where(valid, d, -jnp.inf)
    else:
        d_min = d
        d_max = d
    # Sublane-aligned reduce: (tm, 128) -> (tm//8, 8, 128) -> (8, 128).
    pmin_ref[...] = jnp.min(d_min.reshape(tm // 8, 8, LANES), axis=0)
    pmax_ref[...] = jnp.max(d_max.reshape(tm // 8, 8, LANES), axis=0)


def compute_min_range(data):
    """Returns (min, range) f32 scalars, matching the PyTorch __init__ semantics."""
    flat = jnp.ravel(jnp.asarray(data))
    total = flat.size
    # Pad (only if needed) to a multiple of 8*LANES so the slab is (8k, 128).
    # Pad values are masked out in-kernel, so the value is irrelevant.
    padded = _round_up(max(total, 1), 8 * LANES)
    if padded != total:
        flat = jnp.pad(flat, (0, padded - total))
    rows = padded // LANES
    tm = rows if rows <= MINMAX_TM else MINMAX_TM
    grid = _cdiv(rows, tm)
    needs_mask = (padded != total) or (rows % tm != 0)

    kernel = functools.partial(_minmax_kernel, tm=tm, needs_mask=needs_mask)
    total_s = jnp.array([total], jnp.int32)

    pmin, pmax = pl.pallas_call(
        kernel,
        out_shape=(
            jax.ShapeDtypeStruct((grid * 8, LANES), jnp.float32),
            jax.ShapeDtypeStruct((grid * 8, LANES), jnp.float32),
        ),
        grid=(grid,),
        in_specs=[
            pl.BlockSpec(memory_space=pltpu.MemorySpace.SMEM),
            pl.BlockSpec((tm, LANES), lambda i: (i, 0)),
        ],
        out_specs=(
            pl.BlockSpec((8, LANES), lambda i: (i, 0)),
            pl.BlockSpec((8, LANES), lambda i: (i, 0)),
        ),
        compiler_params=pltpu.CompilerParams(
            dimension_semantics=("parallel",),
            vmem_limit_bytes=VMEM_LIMIT,
        ),
    )(total_s, flat.reshape(rows, LANES))

    minv = jnp.min(pmin)
    rangev = jnp.max(pmax) - minv
    return minv, rangev


# -----------------------------------------------------------------------------
# Kernel 2: forward pass  (x - min) * (1/range)
# -----------------------------------------------------------------------------
def _scaling_kernel(min_ref, inv_ref, x_ref, o_ref):
    # min_ref / inv_ref are (1,) f32 scalars in SMEM.
    x = x_ref[...].astype(jnp.float32)
    o_ref[...] = ((x - min_ref[0]) * inv_ref[0]).astype(o_ref.dtype)


def scaling_forward(x, minv, rangev):
    orig_shape = x.shape
    total = x.size
    # Match torch type promotion: (x - f32_scalar) / f32_scalar -> at least f32.
    out_dtype = jnp.result_type(x.dtype, jnp.float32)

    flat = jnp.ravel(x)
    padded = _round_up(max(total, 1), LANES)
    aligned = padded == total
    if not aligned:
        # Small tail pad (< 128 elements) so the flat array reshapes to (rows, 128).
        flat = jnp.pad(flat, (0, padded - total))
    rows = padded // LANES
    tm = rows if rows <= FWD_TM else FWD_TM      # ragged last block handled by Pallas
    grid = _cdiv(rows, tm)

    min_s = jnp.asarray(minv, jnp.float32).reshape(1)
    inv_s = (1.0 / jnp.asarray(rangev, jnp.float32)).reshape(1)

    out = pl.pallas_call(
        _scaling_kernel,
        out_shape=jax.ShapeDtypeStruct((rows, LANES), out_dtype),
        grid=(grid,),
        in_specs=[
            pl.BlockSpec(memory_space=pltpu.MemorySpace.SMEM),
            pl.BlockSpec(memory_space=pltpu.MemorySpace.SMEM),
            pl.BlockSpec((tm, LANES), lambda i: (i, 0)),
        ],
        out_specs=pl.BlockSpec((tm, LANES), lambda i: (i, 0)),
        compiler_params=pltpu.CompilerParams(
            dimension_semantics=("parallel",),
            vmem_limit_bytes=VMEM_LIMIT,
        ),
    )(min_s, inv_s, flat.reshape(rows, LANES))

    if aligned:
        return out.reshape(orig_shape)           # free metadata reshape, no copy
    return out.reshape(-1)[:total].reshape(orig_shape)


# -----------------------------------------------------------------------------
# Tiny module-like wrapper
# -----------------------------------------------------------------------------
class ScalingTransform:
    def __init__(self, data):
        self.min, self.range = compute_min_range(data)
        # TODO(synk): .to(device/dtype) is host-side bookkeeping; no kernel needed.

    def __call__(self, x):
        return scaling_forward(x, self.min, self.range)


if __name__ == "__main__":
    key = jax.random.PRNGKey(0)
    k_data, k_x, k_x2 = jax.random.split(key, 3)

    # "data" used to fit the transform (with NaN/inf entries to exercise the
    # nan_to_num(d, 0, 0, 0) path), and an NCHW input x.
    data = jax.random.normal(k_data, (64, 128), dtype=jnp.float32) * 5.0 + 2.0
    data = data.at[0, 0].set(jnp.nan)
    data = data.at[1, 1].set(jnp.inf)
    data = data.at[2, 2].set(-jnp.inf)

    x = jax.random.normal(k_x, (2, 4, 16, 16), dtype=jnp.float32) * 3.0

    st = ScalingTransform(data)
    out = jax.block_until_ready(st(x))

    # Pure-JAX reference check.
    d_clean = jnp.where(jnp.isfinite(data), data, 0.0)
    ref_min = jnp.min(d_clean)
    ref_range = jnp.max(d_clean) - ref_min
    ref = (x - ref_min) / ref_range
    assert out.shape == x.shape and out.dtype == x.dtype
    assert jnp.allclose(out, ref, rtol=1e-6, atol=1e-6)

    # Ragged forward path (size not a multiple of 128).
    x_odd = jax.random.normal(k_x2, (3, 5, 7), dtype=jnp.float32)
    out_odd = jax.block_until_ready(st(x_odd))
    ref_odd = (x_odd - ref_min) / ref_range
    assert out_odd.shape == x_odd.shape
    assert jnp.allclose(out_odd, ref_odd, rtol=1e-6, atol=1e-6)

    # Ragged init path (data size not a multiple of 8*128) to exercise the
    # in-kernel tail masking of the min/max kernel.
    data_odd = data[:, :100]  # 6400 elements
    st2 = ScalingTransform(data_odd)
    d2_clean = jnp.where(jnp.isfinite(data_odd), data_odd, 0.0)
    ref2_min = jnp.min(d2_clean)
    ref2_range = jnp.max(d2_clean) - ref2_min
    assert jnp.allclose(st2.min, ref2_min, rtol=1e-6, atol=1e-6)
    assert jnp.allclose(st2.range, ref2_range, rtol=1e-6, atol=1e-6)
    out2 = jax.block_until_ready(st2(x))
    assert jnp.allclose(out2, (x - ref2_min) / ref2_range, rtol=1e-6, atol=1e-6)

    print("KERNEL_OK")
</pallas_src>

<mosaic_0001>
module attributes {stable_mosaic.version = 11 : i64} {
  func.func @_minmax_kernel(%arg0: i32, %arg1: memref<1xi32, #tpu.memory_space<smem>>, %arg2: memref<64x128xf32, #tpu.memory_space<vmem>>, %arg3: memref<8x128xf32, #tpu.memory_space<vmem>>, %arg4: memref<8x128xf32, #tpu.memory_space<vmem>>) attributes {dimension_semantics = [#tpu.dimension_semantics<parallel>], iteration_bounds = array<i64: 1>, scalar_prefetch = 0 : i64, scratch_operands = 0 : i64, tpu.core_type = #tpu.core_type<tc>, window_params = [{transform_indices = @transform_0, window_bounds = array<i64: 1>}, {transform_indices = @transform_1, window_bounds = array<i64: 64, 128>}, {transform_indices = @transform_2, window_bounds = array<i64: 8, 128>}, {transform_indices = @transform_3, window_bounds = array<i64: 8, 128>}]} {
    %c0 = arith.constant 0 : index
    %c0_0 = arith.constant 0 : index
    %0 = vector.load %arg2[%c0, %c0_0] : memref<64x128xf32, #tpu.memory_space<vmem>>, vector<64x128xf32>
    %1 = tpu.weird %0 : vector<64x128xf32> -> vector<64x128xi1>
    %cst = arith.constant dense<true> : vector<64x128xi1>
    %2 = arith.xori %1, %cst : vector<64x128xi1>
    %cst_1 = arith.constant 0.000000e+00 : f32
    %3 = vector.broadcast %cst_1 : f32 to vector<64x128xf32>
    %4 = arith.select %2, %0, %3 : vector<64x128xi1>, vector<64x128xf32>
    %5 = vector.shape_cast %4 : vector<64x128xf32> to vector<8x8x128xf32>
    %cst_2 = arith.constant dense<0x7F800000> : vector<8x128xf32>
    %6 = vector.multi_reduction <minimumf>, %5, %cst_2 [0] : vector<8x8x128xf32> to vector<8x128xf32>
    %c0_3 = arith.constant 0 : index
    %c0_4 = arith.constant 0 : index
    %7 = vector.load %arg3[%c0_3, %c0_4] : memref<8x128xf32, #tpu.memory_space<vmem>>, vector<8x128xf32>
    tpu.vector_store %arg3[%c0_3, %c0_4], %6 {strides = array<i32>} : memref<8x128xf32, #tpu.memory_space<vmem>>, vector<8x128xf32>,
    %8 = vector.shape_cast %4 : vector<64x128xf32> to vector<8x8x128xf32>
    %cst_5 = arith.constant dense<0xFF800000> : vector<8x128xf32>
    %9 = vector.multi_reduction <maximumf>, %8, %cst_5 [0] : vector<8x8x128xf32> to vector<8x128xf32>
    %c0_6 = arith.constant 0 : index
    %c0_7 = arith.constant 0 : index
    %10 = vector.load %arg4[%c0_6, %c0_7] : memref<8x128xf32, #tpu.memory_space<vmem>>, vector<8x128xf32>
    tpu.vector_store %arg4[%c0_6, %c0_7], %9 {strides = array<i32>} : memref<8x128xf32, #tpu.memory_space<vmem>>, vector<8x128xf32>,
    return
  }
  func.func @transform_0(%arg0: i32) -> i32 {
    %c0_i32 = arith.constant 0 : i32
    %c0_i32_0 = arith.constant 0 : i32
    return %c0_i32 : i32
  }
  func.func @transform_1(%arg0: i32) -> (i32, i32) {
    %c0_i32 = arith.constant 0 : i32
    %c0_i32_0 = arith.constant 0 : i32
    return %arg0, %c0_i32 : i32, i32
  }
  func.func @transform_2(%arg0: i32) -> (i32, i32) {
    %c0_i32 = arith.constant 0 : i32
    %c0_i32_0 = arith.constant 0 : i32
    return %arg0, %c0_i32 : i32, i32
  }
  func.func @transform_3(%arg0: i32) -> (i32, i32) {
    %c0_i32 = arith.constant 0 : i32
    %c0_i32_0 = arith.constant 0 : i32
    return %arg0, %c0_i32 : i32, i32
  }
}

</mosaic_0001>

<llo_original>
// kernel: tpu_custom_call.1
$region0: #{tpu_custom_call.1}
  #allocation0 [shape = 'u32[]', space=smem, size = 0x4, offset = 0x4, fixed_abs, tag = 'smem constant byte address 0x4 - core index']
  #allocation1 [shape = 'u32[144,128]{1,0:T(1,128)}', space=vmem, size = 0x12000, scoped, tag = 'internal scratch']
  #allocation2 [shape = 's32[1]{0:T(128)S(6)}', space=smem, size = 0x200, scoped, tag = 'scoped memory for tpu_custom_call.1']
  %s0 = inlined_call_operand.<no memory space> [shape: s32[1], index: 0, kind: input, shape index: {}]
  %s1 = inlined_call_operand.hbm [shape: f32[64,128], index: 1, kind: input, shape index: {}]
  %s2 = inlined_call_operand.hbm [shape: f32[8,128], index: 2, kind: output, shape index: {0}]
  %s3 = inlined_call_operand.hbm [shape: f32[8,128], index: 3, kind: output, shape index: {1}]
  %4 = xla_tuple %s2, %s3
  %s5 = sld [smem:[#allocation0]]
  $region30: #{tpu_custom_call.1} parent=0
    _
  %s7 = ssub.s32 1, %s5
  %s8 = scalar_select 0, %s7, %s5
  %9 = sst [smem:[#allocation2]] %s0
  $region1: #{tpu_custom_call.1} parent=0
    #allocation3 [shape = 'u8[32768]{0}', space=vmem, size = 0x8000, scoped, tag = 'input window, operand 1, single buffered']
    #allocation4 [shape = 's32[1]{0}', space=sflag, size = 0x4, scoped, tag = 'scoped memory for tpu_custom_call.1']
    #allocation5 [shape = 's32[1]{0}', space=sflag, size = 0x4, scoped, tag = 'scoped memory for tpu_custom_call.1']
    #allocation6 [shape = 'u8[4096]{0}', space=vmem, size = 0x1000, scoped, tag = 'output window, operand 0, single buffered']
    #allocation7 [shape = 'u8[4096]{0}', space=vmem, size = 0x1000, scoped, tag = 'output window, operand 1, single buffered']
    #allocation8 [shape = 's32[1]{0}', space=sflag, size = 0x4, scoped, tag = 'scoped memory for tpu_custom_call.1']
    %10 = vsyncpa [#allocation4], 0
    %11 = vsyncpa [#allocation5], 0
    %12 = vsyncpa [#allocation8], 0
    // Predicated region
    $region2: #{tpu_custom_call.1} parent=1 // pred_check
      _
    $region3: #{tpu_custom_call.1} parent=1 // pred_check_branch
      %14 = sbr.rel (0) target = $region5
    $region4: #{tpu_custom_call.1} parent=1 // pred_region
      _
    $region5: #{tpu_custom_call.1} parent=1 // pred_fallthru
      _
    // Predicated region
    $region6: #{tpu_custom_call.1} parent=1 // pred_check
      _
    $region7: #{tpu_custom_call.1} parent=1 // pred_check_branch
      %16 = sbr.rel (0) target = $region9
    $region8: #{tpu_custom_call.1} parent=1 // pred_region
      %s18 = ssub.s32 1024, 1024
      %19 = vsyncadd [#allocation4], %s18
      %s20 = sshll.u32 [#allocation3], 4
      %s21 = int_to_ptr.vmem [resolvable:$true] %s20
      %26 = dma.hbm_to_vmem [thread:$0]  %s1, 1024, %s21, [#allocation4], 128, 128, 8
    $region9: #{tpu_custom_call.1} parent=1 // pred_fallthru
      _
    // Predicated region
    $region10: #{tpu_custom_call.1} parent=1 // pred_check
      _
    $region11: #{tpu_custom_call.1} parent=1 // pred_check_branch
      %28 = sbr.rel (0) target = $region13
    $region12: #{tpu_custom_call.1} parent=1 // pred_region
      %29 = dma.done [#allocation4], 1024
    $region13: #{tpu_custom_call.1} parent=1 // pred_fallthru
      _
    %v30 = vld [vmem:[#allocation3] sm:$0xff]
    %v31 = vld [vmem:[#allocation3 + $0x8] sm:$0xff]
    %v32 = vld [vmem:[#allocation3 + $0x10] sm:$0xff]
    %v33 = vld [vmem:[#allocation3 + $0x18] sm:$0xff]
    %v34 = vld [vmem:[#allocation3 + $0x20] sm:$0xff]
    %v35 = vld [vmem:[#allocation3 + $0x28] sm:$0xff]
    %v36 = vld [vmem:[#allocation3 + $0x30] sm:$0xff]
    %v37 = vld [vmem:[#allocation3 + $0x38] sm:$0xff]
    %vm38 = vweird.f32 %v30
    %vm39 = vweird.f32 %v31
    %vm40 = vweird.f32 %v32
    %vm41 = vweird.f32 %v33
    %vm42 = vweird.f32 %v34
    %vm43 = vweird.f32 %v35
    %vm44 = vweird.f32 %v36
    %vm45 = vweird.f32 %v37
    %vm46 = vmxor %vm38, 1
    %vm47 = vmxor %vm39, 1
    %vm48 = vmxor %vm40, 1
    %vm49 = vmxor %vm41, 1
    %vm50 = vmxor %vm42, 1
    %vm51 = vmxor %vm43, 1
    %vm52 = vmxor %vm44, 1
    %vm53 = vmxor %vm45, 1
    %v54 = vsel %vm46, %v30, 0.0
    %v55 = vsel %vm47, %v31, 0.0
    %v56 = vsel %vm48, %v32, 0.0
    %v57 = vsel %vm49, %v33, 0.0
    %v58 = vsel %vm50, %v34, 0.0
    %v59 = vsel %vm51, %v35, 0.0
    %v60 = vsel %vm52, %v36, 0.0
    %v61 = vsel %vm53, %v37, 0.0
    %v62 = vmin.f32 %v54, %v58
    %v63 = vmin.f32 %v55, %v59
    %v64 = vmin.f32 %v56, %v60
    %v65 = vmin.f32 %v57, %v61
    %v66 = vmin.f32 %v62, %v63
    %v67 = vmin.f32 %v64, %v65
    %v68 = vmin.f32 %v66, %v67
    %69 = vst [vmem:[#allocation6] sm:$0xff] %v68
    %v70 = vmax.f32 %v54, %v58
    %v71 = vmax.f32 %v55, %v59
    %v72 = vmax.f32 %v56, %v60
    %v73 = vmax.f32 %v57, %v61
    %v74 = vmax.f32 %v70, %v71
    %v75 = vmax.f32 %v72, %v73
    %v76 = vmax.f32 %v74, %v75
    %77 = vst [vmem:[#allocation7] sm:$0xff] %v76
    // Predicated region
    $region14: #{tpu_custom_call.1} parent=1 // pred_check
      _
    $region15: #{tpu_custom_call.1} parent=1 // pred_check_branch
      %79 = sbr.rel (0) target = $region17
    $region16: #{tpu_custom_call.1} parent=1 // pred_region
      %s81 = ssub.s32 128, 128
      %82 = vsyncadd [#allocation5], %s81
      %s84 = sshll.u32 [#allocation6], 4
      %s85 = int_to_ptr.vmem [resolvable:$true] %s84
      %87 = dma.vmem_to_hbm [thread:$0]  %s85, 128, %s2, [#allocation5]
    $region17: #{tpu_custom_call.1} parent=1 // pred_fallthru
      _
    // Predicated region
    $region18: #{tpu_custom_call.1} parent=1 // pred_check
      _
    $region19: #{tpu_custom_call.1} parent=1 // pred_check_branch
      %89 = sbr.rel (0) target = $region21
    $region20: #{tpu_custom_call.1} parent=1 // pred_region
      %s91 = ssub.s32 128, 128
      %92 = vsyncadd [#allocation8], %s91
      %s94 = sshll.u32 [#allocation7], 4
      %s95 = int_to_ptr.vmem [resolvable:$true] %s94
      %97 = dma.vmem_to_hbm [thread:$0]  %s95, 128, %s3, [#allocation8]
    $region21: #{tpu_custom_call.1} parent=1 // pred_fallthru
      _
    // Predicated region
    $region22: #{tpu_custom_call.1} parent=1 // pred_check
      _
    $region23: #{tpu_custom_call.1} parent=1 // pred_check_branch
      %99 = sbr.rel (0) target = $region25
    $region24: #{tpu_custom_call.1} parent=1 // pred_region
      %100 = dma.done [#allocation5], 128
    $region25: #{tpu_custom_call.1} parent=1 // pred_fallthru
      _
    // Predicated region
    $region26: #{tpu_custom_call.1} parent=1 // pred_check
      _
    $region27: #{tpu_custom_call.1} parent=1 // pred_check_branch
      %102 = sbr.rel (0) target = $region29
    $region28: #{tpu_custom_call.1} parent=1 // pred_region
      %103 = dma.done [#allocation8], 128
    $region29: #{tpu_custom_call.1} parent=1 // pred_fallthru
      _
    %104 = vsyncpa [#allocation4], 1
    %105 = vsyncpa [#allocation5], 1
    %106 = vsyncpa [#allocation8], 1

</llo_original>
